<compile_context>
chip_gen: v6e
topology: v6e:2x2x1
jax: 0.10.0
libtpu: 0.0.40
codegen_flags: <defaults>
</compile_context>

<pallas_src>
import jax
import jax.numpy as jnp
from jax.experimental import pallas as pl
from jax.experimental.pallas import tpu as pltpu

EPS = 1e-4  # ProtoPNet epsilon in distance_2_similarity


def ppnet_adv_kernel(xmb_ref, w1_ref, b1_ref, w2_ref, b2_ref,
                     proto_ref, psq_ref, out_ref):
    """One (core c, batch b, spatial tile s) grid step; pixels on the lane axis.

    xmb   : (3, C, T) stacked stream block = [x, mask, img*(1-mask)]
    w1    : (D, C)   b1 : (D, 1)      w2 : (D, D)   b2 : (D, 1)
    proto : (P_SUB, D)   psq : (P_SUB, 1)
    out   : (P_SUB, 1) resident per-(core, batch) running-min squared distance
    """
    s = pl.program_id(2)

    # --- init the resident accumulator (running MIN -> +inf) --------------------
    @pl.when(s == 0)
    def _init():
        out_ref[...] = jnp.full(out_ref.shape, jnp.inf, out_ref.dtype)

    # --- adversarial blend: x2 = x*m + img*(1-m), base pre-folded outside -------
    x = xmb_ref[0].astype(jnp.float32)
    m = xmb_ref[1].astype(jnp.float32)
    base = xmb_ref[2].astype(jnp.float32)
    x2 = x * m + base                                            # (C, T)

    cdt = w1_ref.dtype   # MXU operand dtype (bf16 by default, f32 on exact path)

    # --- add-on layer 1 (1x1 conv) on the MXU (C contraction is mostly padding,
    #     but the MXU slot has slack while the 4-wide VALU does not) -------------
    z1 = jnp.dot(w1_ref[...], x2.astype(cdt),
                 preferred_element_type=jnp.float32) + b1_ref[...]
    f1 = jnp.maximum(z1, 0.0)                                    # (D, T)

    # --- add-on layer 2 (1x1 conv) on the MXU; sigmoid on the EUP ---------------
    z2 = jnp.dot(w2_ref[...], f1.astype(cdt),
                 preferred_element_type=jnp.float32) + b2_ref[...]
    f = jax.nn.sigmoid(z2)                                       # (D, T)

    # --- squared L2 distances to selected prototypes, lane-dense (P_SUB, T) -----
    cross = jnp.dot(proto_ref[...], f.astype(cdt),
                    preferred_element_type=jnp.float32)
    fsq = jnp.sum(f * f, axis=0, keepdims=True)                  # (1, T)
    dist = jnp.maximum(psq_ref[...] - 2.0 * cross + fsq, 0.0)    # (P_SUB, T)

    # --- running MIN over spatial positions; sim = log((d+1)/(d+eps)) is
    #     strictly decreasing in d, so max(sim) == sim(min(dist)).  The logs are
    #     deferred to the (B, Psel)-sized epilogue outside the kernel. -----------
    out_ref[...] = jnp.minimum(out_ref[...],
                               jnp.min(dist, axis=1, keepdims=True))


def _tile_footprint_bytes(t, c, d, p_sub, sbytes):
    streams = 2 * 3 * c * t * sbytes                    # double-buffered stacked stream
    temps = 4 * t * (3 * c + 2 * d + 2 * p_sub + 2)     # f32 working set (x2/f1/f/cross/dist)
    return streams + temps


def _pick_spatial_tile(hw, c, d, p_sub, sbytes, prefer_even, budget=24 << 20):
    """Largest lane-aligned spatial tile that divides HW and fits the budget."""
    candidates = (8192, 4096, 2048, 1024, 512, 256, 128)
    divisors = [t for t in candidates
                if hw % t == 0 and _tile_footprint_bytes(t, c, d, p_sub, sbytes) <= budget]
    if not divisors:
        # TODO(synk): ragged HW (not a multiple of 128) falls back to a single
        # full-extent tile instead of padded multi-tile streaming.
        return hw
    if prefer_even:
        # prefer a tile count that can be split evenly across 2 TensorCores (v7x)
        for t in divisors:
            n = hw // t
            if n >= 2 and n % 2 == 0:
                return t
    return divisors[0]


def ppnet_adversarial_forward(x, img, mask, w1, b1, w2, b2, prototypes,
                              proto_nums, *, stream_dtype=jnp.bfloat16):
    """x, img, mask: NCHW float32.  Returns a (1, 1) array (mean max activation)."""
    B, C, H, W = x.shape
    HW = H * W
    D = w1.shape[1]
    sbytes = jnp.dtype(stream_dtype).itemsize

    # Selected prototypes, rows zero-padded up to a sublane multiple; padded rows
    # are ignored in the epilogue slice below.
    p_sel = jnp.asarray(prototypes, jnp.float32)[proto_nums]     # (Psel, D)
    Psel = int(p_sel.shape[0])
    P_SUB = max(8, ((Psel + 7) // 8) * 8)
    p_pad = jnp.pad(p_sel, ((0, P_SUB - Psel), (0, 0)))
    psq = jnp.sum(p_pad * p_pad, axis=1, keepdims=True)          # (P_SUB, 1), f32

    TILE = _pick_spatial_tile(HW, C, D, P_SUB, sbytes, prefer_even=(B == 1))
    S_TILES = HW // TILE if TILE != HW else 1
    # v7x spatial core-split for the common B=1 adversarial case (2 TCs/chip);
    # on single-TC chips the extra "parallel" axis is just a loop.
    NCORES = 2 if (B == 1 and S_TILES >= 2 and S_TILES % 2 == 0) else 1
    S_PER_CORE = S_TILES // NCORES

    # One stacked stream (single DMA descriptor per step): [x, mask, img*(1-mask)]
    def prep(t):
        return jnp.asarray(t, jnp.float32).reshape(B, C, HW)

    xmb = jnp.stack([prep(x), prep(mask), prep(img * (1.0 - mask))],
                    axis=1).astype(stream_dtype)                 # (B, 3, C, HW)

    # Transposed weights keep pixels on lanes; MXU operands in the stream dtype.
    w1_t = jnp.asarray(w1, jnp.float32).T.astype(stream_dtype)   # (D, C)
    w2_t = jnp.asarray(w2, jnp.float32).T.astype(stream_dtype)   # (D, D)
    p_c = p_pad.astype(stream_dtype)                             # (P_SUB, D)
    b1_c = jnp.asarray(b1, jnp.float32).reshape(D, 1)
    b2_c = jnp.asarray(b2, jnp.float32).reshape(D, 1)

    weight_bytes = sbytes * (D * C + D * D + P_SUB * D) + 4 * (2 * D + P_SUB)
    footprint = _tile_footprint_bytes(TILE, C, D, P_SUB, sbytes)
    vmem_limit = int(min(32 << 20,
                         max(1 << 20, footprint + 2 * weight_bytes + (2 << 20))))

    flops = (2 * B * HW * (C * D + D * D + P_SUB * D)
             + B * HW * (2 * C + 5 * D + 4 * P_SUB))
    transcendentals = B * HW * D                                 # sigmoid only
    bytes_accessed = 3 * B * C * HW * sbytes + weight_bytes + 4 * NCORES * B * P_SUB

    stream_spec = pl.BlockSpec(
        (None, 3, C, TILE), lambda c, b, s: (b, 0, 0, c * S_PER_CORE + s))

    def const_spec(shape):
        return pl.BlockSpec(shape, lambda c, b, s: (0, 0))

    out = pl.pallas_call(
        ppnet_adv_kernel,
        out_shape=jax.ShapeDtypeStruct((NCORES, B, P_SUB, 1), jnp.float32),
        grid=(NCORES, B, S_PER_CORE),
        in_specs=[
            stream_spec,
            const_spec((D, C)), const_spec((D, 1)),
            const_spec((D, D)), const_spec((D, 1)),
            const_spec((P_SUB, D)), const_spec((P_SUB, 1)),
        ],
        out_specs=pl.BlockSpec((None, None, P_SUB, 1),
                               lambda c, b, s: (c, b, 0, 0)),
        compiler_params=pltpu.CompilerParams(
            dimension_semantics=("parallel", "parallel", "arbitrary"),
            vmem_limit_bytes=vmem_limit),
        cost_estimate=pl.CostEstimate(
            flops=flops, transcendentals=transcendentals,
            bytes_accessed=bytes_accessed),
    )(xmb, w1_t, b1_c, w2_t, b2_c, p_c, psq)

    # Tiny epilogue: min over core halves, drop padded prototype rows, apply
    # distance_2_similarity once, mean over (batch, selected prototypes).
    dmin = jnp.min(out, axis=0)[:, :Psel, 0]                     # (B, Psel)
    sim = jnp.log(dmin + 1.0) - jnp.log(dmin + EPS)
    return jnp.mean(sim).reshape(1, 1)


def reference_forward(x, img, mask, w1, b1, w2, b2, prototypes, proto_nums):
    """Plain-JAX f32 reference of the same forward (for validation)."""
    B, C, H, W = x.shape
    hi = jax.lax.Precision.HIGHEST
    x2 = x * mask + img * (1.0 - mask)
    xf = jnp.transpose(x2, (0, 2, 3, 1)).reshape(B * H * W, C)
    f1 = jnp.maximum(jnp.dot(xf, w1, precision=hi) + b1, 0.0)
    f = jax.nn.sigmoid(jnp.dot(f1, w2, precision=hi) + b2)
    p = prototypes[proto_nums]                                   # (Psel, D)
    dist = (jnp.sum(f * f, -1, keepdims=True)
            - 2.0 * jnp.dot(f, p.T, precision=hi)
            + jnp.sum(p * p, -1)[None, :])
    dist = jnp.maximum(dist, 0.0)
    sim = jnp.log((dist + 1.0) / (dist + EPS))
    max_act = jnp.max(sim.reshape(B, H * W, -1), axis=1)
    return jnp.mean(max_act).reshape(1, 1)


if __name__ == "__main__":
    key = jax.random.PRNGKey(0)
    kx, kimg, kmask, kw1, kw2, kb1, kb2, kp = jax.random.split(key, 8)

    # small shapes consistent with the module's forward
    B, C, H, W = 2, 4, 16, 16
    D = 32                 # feature / prototype channel dim
    P = 10                 # total prototypes in the synthetic model
    proto_nums = jnp.array([1, 3, 7], dtype=jnp.int32)   # prototypes under attack

    x = jax.random.normal(kx, (B, C, H, W), dtype=jnp.float32)
    img = jax.random.normal(kimg, (B, C, H, W), dtype=jnp.float32)
    # binary mask: 1 where pixels may be modified
    mask = (jax.random.uniform(kmask, (B, C, H, W)) > 0.5).astype(jnp.float32)

    # deterministic synthetic PPNet parameters
    w1 = 0.5 * jax.random.normal(kw1, (C, D), dtype=jnp.float32)
    b1 = 0.1 * jax.random.normal(kb1, (1, D), dtype=jnp.float32)
    w2 = 0.5 * jax.random.normal(kw2, (D, D), dtype=jnp.float32)
    b2 = 0.1 * jax.random.normal(kb2, (1, D), dtype=jnp.float32)
    prototypes = 0.5 * jax.random.normal(kp, (P, D), dtype=jnp.float32) + 0.5

    ref = reference_forward(x, img, mask, w1, b1, w2, b2, prototypes, proto_nums)

    # exact-dtype path: f32 streaming + f32 MXU operands
    out_f32 = ppnet_adversarial_forward(x, img, mask, w1, b1, w2, b2,
                                        prototypes, proto_nums,
                                        stream_dtype=jnp.float32)
    out_f32 = jax.block_until_ready(out_f32)
    assert out_f32.shape == (1, 1), out_f32.shape
    assert jnp.allclose(out_f32, ref, rtol=5e-3, atol=5e-3), (out_f32, ref)

    # default path: bf16 HBM streaming + bf16 MXU operands, f32 accumulation;
    # looser tolerance accounts for bf16 rounding vs the f32 reference.
    out_bf16 = ppnet_adversarial_forward(x, img, mask, w1, b1, w2, b2,
                                         prototypes, proto_nums)
    out_bf16 = jax.block_until_ready(out_bf16)
    assert out_bf16.shape == (1, 1), out_bf16.shape
    assert jnp.allclose(out_bf16, ref, rtol=3e-2, atol=3e-2), (out_bf16, ref)

    # B=1 case exercises the v7x spatial core-split path (grid leading axis = 2)
    ref1 = reference_forward(x[:1], img[:1], mask[:1], w1, b1, w2, b2,
                             prototypes, proto_nums)
    out1 = ppnet_adversarial_forward(x[:1], img[:1], mask[:1], w1, b1, w2, b2,
                                     prototypes, proto_nums)
    out1 = jax.block_until_ready(out1)
    assert out1.shape == (1, 1), out1.shape
    assert jnp.allclose(out1, ref1, rtol=3e-2, atol=3e-2), (out1, ref1)

    print("KERNEL_OK")
</pallas_src>

<mosaic_0001>
module attributes {stable_mosaic.version = 11 : i64} {
  func.func @ppnet_adv_kernel(%arg0: i32, %arg1: i32, %arg2: i32, %arg3: memref<1x3x4x256xf32, #tpu.memory_space<vmem>>, %arg4: memref<32x4xf32, #tpu.memory_space<vmem>>, %arg5: memref<32x1xf32, #tpu.memory_space<vmem>>, %arg6: memref<32x32xf32, #tpu.memory_space<vmem>>, %arg7: memref<32x1xf32, #tpu.memory_space<vmem>>, %arg8: memref<8x32xf32, #tpu.memory_space<vmem>>, %arg9: memref<8x1xf32, #tpu.memory_space<vmem>>, %arg10: memref<1x1x8x1xf32, #tpu.memory_space<vmem>>) attributes {dimension_semantics = [#tpu.dimension_semantics<parallel>, #tpu.dimension_semantics<parallel>, #tpu.dimension_semantics<arbitrary>], iteration_bounds = array<i64: 1, 2, 1>, scalar_prefetch = 0 : i64, scratch_operands = 0 : i64, tpu.core_type = #tpu.core_type<tc>, window_params = [{transform_indices = @transform_0, window_bounds = array<i64: 1, 3, 4, 256>}, {pipeline_mode = #tpu.pipeline_mode<synchronous>, transform_indices = @transform_1, window_bounds = array<i64: 32, 4>}, {pipeline_mode = #tpu.pipeline_mode<synchronous>, transform_indices = @transform_2, window_bounds = array<i64: 32, 1>}, {pipeline_mode = #tpu.pipeline_mode<synchronous>, transform_indices = @transform_3, window_bounds = array<i64: 32, 32>}, {pipeline_mode = #tpu.pipeline_mode<synchronous>, transform_indices = @transform_4, window_bounds = array<i64: 32, 1>}, {pipeline_mode = #tpu.pipeline_mode<synchronous>, transform_indices = @transform_5, window_bounds = array<i64: 8, 32>}, {pipeline_mode = #tpu.pipeline_mode<synchronous>, transform_indices = @transform_6, window_bounds = array<i64: 8, 1>}, {transform_indices = @transform_7, window_bounds = array<i64: 1, 1, 8, 1>}]} {
    %c0_i32 = arith.constant 0 : i32
    %0 = arith.cmpi eq, %arg2, %c0_i32 : i32
    %1 = arith.extui %0 : i1 to i32
    %c0_i32_0 = arith.constant 0 : i32
    %2 = arith.cmpi ne, %1, %c0_i32_0 : i32
    scf.if %2 {
      %cst_38 = arith.constant 0x7F800000 : f32
      %50 = vector.broadcast %cst_38 : f32 to vector<8x1xf32>
      %c0_39 = arith.constant 0 : index
      %c0_40 = arith.constant 0 : index
      %c0_41 = arith.constant 0 : index
      %c0_42 = arith.constant 0 : index
      %51 = vector.load %arg10[%c0_39, %c0_40, %c0_41, %c0_42] : memref<1x1x8x1xf32, #tpu.memory_space<vmem>>, vector<1x1x8x1xf32>
      %52 = vector.shape_cast %51 : vector<1x1x8x1xf32> to vector<8x1xf32>
      %53 = vector.shape_cast %50 : vector<8x1xf32> to vector<1x1x8x1xf32>
      tpu.vector_store %arg10[%c0_39, %c0_40, %c0_41, %c0_42], %53 {strides = array<i32>} : memref<1x1x8x1xf32, #tpu.memory_space<vmem>>, vector<1x1x8x1xf32>,
    } else {
    }
    %c0 = arith.constant 0 : index
    %c0_1 = arith.constant 0 : index
    %c0_2 = arith.constant 0 : index
    %c0_3 = arith.constant 0 : index
    %3 = vector.load %arg3[%c0, %c0_1, %c0_2, %c0_3] : memref<1x3x4x256xf32, #tpu.memory_space<vmem>>, vector<1x1x4x256xf32>
    %4 = vector.shape_cast %3 : vector<1x1x4x256xf32> to vector<4x256xf32>
    %c0_4 = arith.constant 0 : index
    %c1 = arith.constant 1 : index
    %c0_5 = arith.constant 0 : index
    %c0_6 = arith.constant 0 : index
    %5 = vector.load %arg3[%c0_4, %c1, %c0_5, %c0_6] : memref<1x3x4x256xf32, #tpu.memory_space<vmem>>, vector<1x1x4x256xf32>
    %6 = vector.shape_cast %5 : vector<1x1x4x256xf32> to vector<4x256xf32>
    %c0_7 = arith.constant 0 : index
    %c2 = arith.constant 2 : index
    %c0_8 = arith.constant 0 : index
    %c0_9 = arith.constant 0 : index
    %7 = vector.load %arg3[%c0_7, %c2, %c0_8, %c0_9] : memref<1x3x4x256xf32, #tpu.memory_space<vmem>>, vector<1x1x4x256xf32>
    %8 = vector.shape_cast %7 : vector<1x1x4x256xf32> to vector<4x256xf32>
    %9 = arith.mulf %4, %6 : vector<4x256xf32>
    %10 = arith.addf %9, %8 : vector<4x256xf32>
    %c0_10 = arith.constant 0 : index
    %c0_11 = arith.constant 0 : index
    %11 = vector.load %arg4[%c0_10, %c0_11] : memref<32x4xf32, #tpu.memory_space<vmem>>, vector<32x4xf32>
    %cst = arith.constant dense<0.000000e+00> : vector<32x256xf32>
    %12 = tpu.matmul %11, %10, %cst {dimension_numbers = #tpu.dot_dimension_numbers<[1], [0], [0], [1], [0, 0, 1, 1], [], []>} : vector<32x4xf32>, vector<4x256xf32>, vector<32x256xf32> -> vector<32x256xf32>
    %c0_12 = arith.constant 0 : index
    %c0_13 = arith.constant 0 : index
    %13 = vector.load %arg5[%c0_12, %c0_13] : memref<32x1xf32, #tpu.memory_space<vmem>>, vector<32x1xf32>
    %14 = vector.broadcast %13 : vector<32x1xf32> to vector<32x256xf32>
    %15 = arith.addf %12, %14 : vector<32x256xf32>
    %cst_14 = arith.constant 0.000000e+00 : f32
    %16 = vector.broadcast %cst_14 : f32 to vector<32x256xf32>
    %17 = arith.maximumf %15, %16 : vector<32x256xf32>
    %c0_15 = arith.constant 0 : index
    %c0_16 = arith.constant 0 : index
    %18 = vector.load %arg6[%c0_15, %c0_16] : memref<32x32xf32, #tpu.memory_space<vmem>>, vector<32x32xf32>
    %cst_17 = arith.constant dense<0.000000e+00> : vector<32x256xf32>
    %19 = tpu.matmul %18, %17, %cst_17 {dimension_numbers = #tpu.dot_dimension_numbers<[1], [0], [0], [1], [0, 0, 1, 1], [], []>} : vector<32x32xf32>, vector<32x256xf32>, vector<32x256xf32> -> vector<32x256xf32>
    %c0_18 = arith.constant 0 : index
    %c0_19 = arith.constant 0 : index
    %20 = vector.load %arg7[%c0_18, %c0_19] : memref<32x1xf32, #tpu.memory_space<vmem>>, vector<32x1xf32>
    %21 = vector.broadcast %20 : vector<32x1xf32> to vector<32x256xf32>
    %22 = arith.addf %19, %21 : vector<32x256xf32>
    %23 = arith.negf %22 : vector<32x256xf32>
    %24 = math.exp %23 : vector<32x256xf32>
    %cst_20 = arith.constant 1.000000e+00 : f32
    %25 = vector.broadcast %cst_20 : f32 to vector<32x256xf32>
    %26 = arith.addf %25, %24 : vector<32x256xf32>
    %27 = arith.divf %25, %26 : vector<32x256xf32>
    %c0_21 = arith.constant 0 : index
    %c0_22 = arith.constant 0 : index
    %28 = vector.load %arg8[%c0_21, %c0_22] : memref<8x32xf32, #tpu.memory_space<vmem>>, vector<8x32xf32>
    %cst_23 = arith.constant dense<0.000000e+00> : vector<8x256xf32>
    %29 = tpu.matmul %28, %27, %cst_23 {dimension_numbers = #tpu.dot_dimension_numbers<[1], [0], [0], [1], [0, 0, 1, 1], [], []>} : vector<8x32xf32>, vector<32x256xf32>, vector<8x256xf32> -> vector<8x256xf32>
    %30 = arith.mulf %27, %27 : vector<32x256xf32>
    %cst_24 = arith.constant dense<0.000000e+00> : vector<256xf32>
    %31 = vector.multi_reduction <add>, %30, %cst_24 [0] : vector<32x256xf32> to vector<256xf32>
    %32 = vector.shape_cast %31 : vector<256xf32> to vector<1x256xf32>
    %c0_25 = arith.constant 0 : index
    %c0_26 = arith.constant 0 : index
    %33 = vector.load %arg9[%c0_25, %c0_26] : memref<8x1xf32, #tpu.memory_space<vmem>>, vector<8x1xf32>
    %cst_27 = arith.constant 2.000000e+00 : f32
    %34 = vector.broadcast %cst_27 : f32 to vector<8x256xf32>
    %35 = arith.mulf %34, %29 : vector<8x256xf32>
    %36 = vector.broadcast %33 : vector<8x1xf32> to vector<8x256xf32>
    %37 = arith.subf %36, %35 : vector<8x256xf32>
    %38 = vector.broadcast %32 : vector<1x256xf32> to vector<8x256xf32>
    %39 = arith.addf %37, %38 : vector<8x256xf32>
    %cst_28 = arith.constant 0.000000e+00 : f32
    %40 = vector.broadcast %cst_28 : f32 to vector<8x256xf32>
    %41 = arith.maximumf %39, %40 : vector<8x256xf32>
    %c0_29 = arith.constant 0 : index
    %c0_30 = arith.constant 0 : index
    %c0_31 = arith.constant 0 : index
    %c0_32 = arith.constant 0 : index
    %42 = vector.load %arg10[%c0_29, %c0_30, %c0_31, %c0_32] : memref<1x1x8x1xf32, #tpu.memory_space<vmem>>, vector<1x1x8x1xf32>
    %43 = vector.shape_cast %42 : vector<1x1x8x1xf32> to vector<8x1xf32>
    %cst_33 = arith.constant dense<0x7F800000> : vector<8xf32>
    %44 = vector.multi_reduction <minimumf>, %41, %cst_33 [1] : vector<8x256xf32> to vector<8xf32>
    %45 = vector.shape_cast %44 : vector<8xf32> to vector<8x1xf32>
    %46 = arith.minimumf %43, %45 : vector<8x1xf32>
    %c0_34 = arith.constant 0 : index
    %c0_35 = arith.constant 0 : index
    %c0_36 = arith.constant 0 : index
    %c0_37 = arith.constant 0 : index
    %47 = vector.load %arg10[%c0_34, %c0_35, %c0_36, %c0_37] : memref<1x1x8x1xf32, #tpu.memory_space<vmem>>, vector<1x1x8x1xf32>
    %48 = vector.shape_cast %47 : vector<1x1x8x1xf32> to vector<8x1xf32>
    %49 = vector.shape_cast %46 : vector<8x1xf32> to vector<1x1x8x1xf32>
    tpu.vector_store %arg10[%c0_34, %c0_35, %c0_36, %c0_37], %49 {strides = array<i32>} : memref<1x1x8x1xf32, #tpu.memory_space<vmem>>, vector<1x1x8x1xf32>,
    return
  }
  func.func @transform_0(%arg0: i32, %arg1: i32, %arg2: i32) -> (i32, i32, i32, i32) {
    %c1_i32 = arith.constant 1 : i32
    %0 = arith.muli %arg0, %c1_i32 : i32
    %1 = arith.addi %0, %arg2 : i32
    %c0_i32 = arith.constant 0 : i32
    %c0_i32_0 = arith.constant 0 : i32
    %c0_i32_1 = arith.constant 0 : i32
    return %arg1, %c0_i32, %c0_i32_0, %1 : i32, i32, i32, i32
  }
  func.func @transform_1(%arg0: i32, %arg1: i32, %arg2: i32) -> (i32, i32) {
    %c0_i32 = arith.constant 0 : i32
    %c0_i32_0 = arith.constant 0 : i32
    %c0_i32_1 = arith.constant 0 : i32
    return %c0_i32, %c0_i32_0 : i32, i32
  }
  func.func @transform_2(%arg0: i32, %arg1: i32, %arg2: i32) -> (i32, i32) {
    %c0_i32 = arith.constant 0 : i32
    %c0_i32_0 = arith.constant 0 : i32
    %c0_i32_1 = arith.constant 0 : i32
    return %c0_i32, %c0_i32_0 : i32, i32
  }
  func.func @transform_3(%arg0: i32, %arg1: i32, %arg2: i32) -> (i32, i32) {
    %c0_i32 = arith.constant 0 : i32
    %c0_i32_0 = arith.constant 0 : i32
    %c0_i32_1 = arith.constant 0 : i32
    return %c0_i32, %c0_i32_0 : i32, i32
  }
  func.func @transform_4(%arg0: i32, %arg1: i32, %arg2: i32) -> (i32, i32) {
    %c0_i32 = arith.constant 0 : i32
    %c0_i32_0 = arith.constant 0 : i32
    %c0_i32_1 = arith.constant 0 : i32
    return %c0_i32, %c0_i32_0 : i32, i32
  }
  func.func @transform_5(%arg0: i32, %arg1: i32, %arg2: i32) -> (i32, i32) {
    %c0_i32 = arith.constant 0 : i32
    %c0_i32_0 = arith.constant 0 : i32
    %c0_i32_1 = arith.constant 0 : i32
    return %c0_i32, %c0_i32_0 : i32, i32
  }
  func.func @transform_6(%arg0: i32, %arg1: i32, %arg2: i32) -> (i32, i32) {
    %c0_i32 = arith.constant 0 : i32
    %c0_i32_0 = arith.constant 0 : i32
    %c0_i32_1 = arith.constant 0 : i32
    return %c0_i32, %c0_i32_0 : i32, i32
  }
  func.func @transform_7(%arg0: i32, %arg1: i32, %arg2: i32) -> (i32, i32, i32, i32) {
    %c0_i32 = arith.constant 0 : i32
    %c0_i32_0 = arith.constant 0 : i32
    %c0_i32_1 = arith.constant 0 : i32
    return %arg0, %arg1, %c0_i32, %c0_i32_0 : i32, i32, i32, i32
  }
}

</mosaic_0001>

<llo_original>
// kernel: tpu_custom_call.1
$region0: #{tpu_custom_call.1}
  #allocation0 [shape = 'u32[]', space=smem, size = 0x4, offset = 0x4, fixed_abs, tag = 'smem constant byte address 0x4 - core index']
  #allocation1 [shape = 'u32[144,128]{1,0:T(1,128)}', space=vmem, size = 0x12000, scoped, tag = 'internal scratch']
  %s0 = inlined_call_operand.vmem [shape: f32[2,3,4,256], index: 0, kind: input, shape index: {}]
  %s1 = inlined_call_operand.vmem [shape: f32[32,4], index: 1, kind: input, shape index: {}]
  %s2 = inlined_call_operand.vmem [shape: f32[32,1], index: 2, kind: input, shape index: {}]
  %s3 = inlined_call_operand.vmem [shape: f32[32,32], index: 3, kind: input, shape index: {}]
  %s4 = inlined_call_operand.vmem [shape: f32[32,1], index: 4, kind: input, shape index: {}]
  %s5 = inlined_call_operand.vmem [shape: f32[8,32], index: 5, kind: input, shape index: {}]
  %s6 = inlined_call_operand.vmem [shape: f32[8,1], index: 6, kind: input, shape index: {}]
  %s7 = inlined_call_operand.vmem [shape: f32[1,2,8,1], index: 7, kind: output, shape index: {}]
  %s8 = sld [smem:[#allocation0]]
  $region65: #{tpu_custom_call.1} parent=0
    _
  %s10 = ssub.s32 1, %s8
  %s11 = scalar_select 0, %s10, %s8
  loop: start=0, step=1, limit=4
  $region2: #{tpu_custom_call.1} parent=0 // loop_pre_header
    _
  $region3: #{tpu_custom_call.1} parent=0 // loop_header
    %s13 = sphi 0, %s17
    %p14 = scmp.ge.s32.totalorder %s13, 4
    %s20 = sphi 0, %s39
    %s21 = sphi 0, %s35
    %s22 = sphi 0, %s31
    %s23 = sphi 0, %s20
    %s24 = sphi 0, %s21
    %s25 = sphi 0, %s22
    %s26 = sphi 0, %s23
    %s27 = sphi 0, %s24
    %s28 = sphi 0, %s25
    %s46 = sphi 0, %s48
    %s49 = sphi 0, %s46
    %s50 = sphi 0, %s49
    %s66 = sphi 0, %s50
    %s70 = sphi 0, %s70
    %s72 = sphi 0, %s70
    %s73 = sphi 0, %s72
    %s87 = sphi 0, %s73
    %s91 = sphi 0, %s91
    %s93 = sphi 0, %s91
    %s94 = sphi 0, %s93
    %s108 = sphi 0, %s94
    %s112 = sphi 0, %s112
    %s114 = sphi 0, %s112
    %s115 = sphi 0, %s114
    %s129 = sphi 0, %s115
    %s133 = sphi 0, %s133
    %s135 = sphi 0, %s133
    %s136 = sphi 0, %s135
    %s150 = sphi 0, %s136
    %s154 = sphi 0, %s154
    %s156 = sphi 0, %s154
    %s157 = sphi 0, %s156
    %s171 = sphi 0, %s157
    %s175 = sphi 0, %s175
    %s177 = sphi 0, %s175
    %s178 = sphi 0, %s177
    %s192 = sphi 0, %s178
    %s200 = sphi 0, %s202
    %s203 = sphi 0, %s200
    %s204 = sphi 0, %s203
    %s220 = sphi 0, %s204
  $region4: #{tpu_custom_call.1} parent=0 // loop_header_branch
    %16 = sbr.rel (%p14) target = $region8
  $region5: #{tpu_custom_call.1} parent=0 // loop_body
    %s18 = ssub.s32 %s13, 1
    %s19 = ssub.s32 %s13, 2
    %s29 = sadd.s32 1, %s22
    %p30 = scmp.ge.s32.totalorder %s29, 1
    %s31 = scalar_select %p30, 0, %s29
    %s32 = sadd.s32 1, %s21
    %s33 = scalar_select %p30, %s32, %s21
    %p34 = scmp.ge.s32.totalorder %s33, 2
    %s35 = scalar_select %p34, 0, %s33
    %s36 = sadd.s32 1, %s20
    %s37 = scalar_select %p34, %s36, %s20
    %p38 = scmp.ge.s32.totalorder %s37, 1
    %s39 = scalar_select %p38, 0, %s37
    %s40 = sadd.s32 %s20, %s22
    %s41 = sadd.s32 %s39, %s31
    %s42 = ssub.s32 %s21, %s35
    %s43 = ssub.s32 %s40, %s41
    %s44 = sor.u32 %s42, %s43
    %p45 = scmp.eq.s32.totalorder %s44, 0
    %s47 = sadd.s32 %s46, 1
    %s48 = scalar_select %p45, %s46, %s47
    %p51 = pneg %p45
    %p52 = scmp.eq.s32.totalorder %s13, 1
    %p53 = por %p51, %p52
    %p54 = scmp.ne.s32.totalorder %s46, %s49
    %p55 = scmp.eq.s32.totalorder %s13, 0
    %p56 = por %p54, %p55
    %p57 = scmp.ne.s32.totalorder %s46, %s49
    %p58 = scmp.eq.s32.totalorder %s18, 1
    %p59 = por %p57, %p58
    %p60 = scmp.ne.s32.totalorder %s49, %s50
    %p61 = scmp.eq.s32.totalorder %s18, 0
    %p62 = por %p60, %p61
    %p63 = scmp.ne.s32.totalorder %s49, %s50
    %p64 = scmp.eq.s32.totalorder %s19, 1
    %p65 = por %p63, %p64
    %p67 = scmp.ne.s32.totalorder %s50, %s66
    %p68 = scmp.eq.s32.totalorder %s19, 0
    %p69 = por %p67, %p68
    %s71 = sadd.s32 %s70, 1
    %p74 = scmp.eq.s32.totalorder %s13, 1
    %p75 = scmp.ne.s32.totalorder %s70, %s72
    %p76 = scmp.eq.s32.totalorder %s13, 0
    %p77 = por %p75, %p76
    %p78 = scmp.ne.s32.totalorder %s70, %s72
    %p79 = scmp.eq.s32.totalorder %s18, 1
    %p80 = por %p78, %p79
    %p81 = scmp.ne.s32.totalorder %s72, %s73
    %p82 = scmp.eq.s32.totalorder %s18, 0
    %p83 = por %p81, %p82
    %p84 = scmp.ne.s32.totalorder %s72, %s73
    %p85 = scmp.eq.s32.totalorder %s19, 1
    %p86 = por %p84, %p85
    %p88 = scmp.ne.s32.totalorder %s73, %s87
    %p89 = scmp.eq.s32.totalorder %s19, 0
    %p90 = por %p88, %p89
    %s92 = sadd.s32 %s91, 1
    %p95 = scmp.eq.s32.totalorder %s13, 1
    %p96 = scmp.ne.s32.totalorder %s91, %s93
    %p97 = scmp.eq.s32.totalorder %s13, 0
    %p98 = por %p96, %p97
    %p99 = scmp.ne.s32.totalorder %s91, %s93
    %p100 = scmp.eq.s32.totalorder %s18, 1
    %p101 = por %p99, %p100
    %p102 = scmp.ne.s32.totalorder %s93, %s94
    %p103 = scmp.eq.s32.totalorder %s18, 0
    %p104 = por %p102, %p103
    %p105 = scmp.ne.s32.totalorder %s93, %s94
    %p106 = scmp.eq.s32.totalorder %s19, 1
    %p107 = por %p105, %p106
    %p109 = scmp.ne.s32.totalorder %s94, %s108
    %p110 = scmp.eq.s32.totalorder %s19, 0
    %p111 = por %p109, %p110
    %s113 = sadd.s32 %s112, 1
    %p116 = scmp.eq.s32.totalorder %s13, 1
    %p117 = scmp.ne.s32.totalorder %s112, %s114
    %p118 = scmp.eq.s32.totalorder %s13, 0
    %p119 = por %p117, %p118
    %p120 = scmp.ne.s32.totalorder %s112, %s114
    %p121 = scmp.eq.s32.totalorder %s18, 1
    %p122 = por %p120, %p121
    %p123 = scmp.ne.s32.totalorder %s114, %s115
    %p124 = scmp.eq.s32.totalorder %s18, 0
    %p125 = por %p123, %p124
    %p126 = scmp.ne.s32.totalorder %s114, %s115
    %p127 = scmp.eq.s32.totalorder %s19, 1
    %p128 = por %p126, %p127
    %p130 = scmp.ne.s32.totalorder %s115, %s129
    %p131 = scmp.eq.s32.totalorder %s19, 0
    %p132 = por %p130, %p131
    %s134 = sadd.s32 %s133, 1
    %p137 = scmp.eq.s32.totalorder %s13, 1
    %p138 = scmp.ne.s32.totalorder %s133, %s135
    %p139 = scmp.eq.s32.totalorder %s13, 0
    %p140 = por %p138, %p139
    %p141 = scmp.ne.s32.totalorder %s133, %s135
    %p142 = scmp.eq.s32.totalorder %s18, 1
    %p143 = por %p141, %p142
    %p144 = scmp.ne.s32.totalorder %s135, %s136
    %p145 = scmp.eq.s32.totalorder %s18, 0
    %p146 = por %p144, %p145
    %p147 = scmp.ne.s32.totalorder %s135, %s136
    %p148 = scmp.eq.s32.totalorder %s19, 1
    %p149 = por %p147, %p148
    %p151 = scmp.ne.s32.totalorder %s136, %s150
    %p152 = scmp.eq.s32.totalorder %s19, 0
    %p153 = por %p151, %p152
    %s155 = sadd.s32 %s154, 1
    %p158 = scmp.eq.s32.totalorder %s13, 1
    %p159 = scmp.ne.s32.totalorder %s154, %s156
    %p160 = scmp.eq.s32.totalorder %s13, 0
    %p161 = por %p159, %p160
    %p162 = scmp.ne.s32.totalorder %s154, %s156
    %p163 = scmp.eq.s32.totalorder %s18, 1
    %p164 = por %p162, %p163
    %p165 = scmp.ne.s32.totalorder %s156, %s157
    %p166 = scmp.eq.s32.totalorder %s18, 0
    %p167 = por %p165, %p166
    %p168 = scmp.ne.s32.totalorder %s156, %s157
    %p169 = scmp.eq.s32.totalorder %s19, 1
    %p170 = por %p168, %p169
    %p172 = scmp.ne.s32.totalorder %s157, %s171
    %p173 = scmp.eq.s32.totalorder %s19, 0
    %p174 = por %p172, %p173
    %s176 = sadd.s32 %s175, 1
    %p179 = scmp.eq.s32.totalorder %s13, 1
    %p180 = scmp.ne.s32.totalorder %s175, %s177
    %p181 = scmp.eq.s32.totalorder %s13, 0
    %p182 = por %p180, %p181
    %p183 = scmp.ne.s32.totalorder %s175, %s177
    %p184 = scmp.eq.s32.totalorder %s18, 1
    %p185 = por %p183, %p184
    %p186 = scmp.ne.s32.totalorder %s177, %s178
    %p187 = scmp.eq.s32.totalorder %s18, 0
    %p188 = por %p186, %p187
    %p189 = scmp.ne.s32.totalorder %s177, %s178
    %p190 = scmp.eq.s32.totalorder %s19, 1
    %p191 = por %p189, %p190
    %p193 = scmp.ne.s32.totalorder %s178, %s192
    %p194 = scmp.eq.s32.totalorder %s19, 0
    %p195 = por %p193, %p194
    %s196 = ssub.s32 %s20, %s39
    %s197 = ssub.s32 %s21, %s35
    %s198 = sor.u32 %s196, %s197
    %p199 = scmp.eq.s32.totalorder %s198, 0
    %s201 = sadd.s32 %s200, 1
    %s202 = scalar_select %p199, %s200, %s201
    %p205 = pneg %p199
    %p206 = scmp.eq.s32.totalorder %s13, 1
    %p207 = por %p205, %p206
    %p208 = scmp.ne.s32.totalorder %s200, %s203
    %p209 = scmp.eq.s32.totalorder %s13, 0
    %p210 = por %p208, %p209
    %p211 = scmp.ne.s32.totalorder %s200, %s203
    %p212 = scmp.eq.s32.totalorder %s18, 1
    %p213 = por %p211, %p212
    %p214 = scmp.ne.s32.totalorder %s203, %s204
    %p215 = scmp.eq.s32.totalorder %s18, 0
    %p216 = por %p214, %p215
    %p217 = scmp.ne.s32.totalorder %s203, %s204
    %p218 = scmp.eq.s32.totalorder %s19, 1
    %p219 = por %p217, %p218
    %p221 = scmp.ne.s32.totalorder %s204, %s220
    %p222 = scmp.eq.s32.totalorder %s19, 0
    %p223 = por %p221, %p222
    %p224 = scmp.le.s32.totalorder 1, %s13
    %p225 = scmp.lt.s32.totalorder %s13, 3
    %p226 = pnand %p224, %p225
    %p227 = pneg %p226
    // Predicated region
    $region9: #{tpu_custom_call.1} parent=5 // pred_check
      _
    $region10: #{tpu_custom_call.1} parent=5 // pred_check_branch
      %229 = sbr.rel (%p226) target = $region12
    $region11: #{tpu_custom_call.1} parent=5 // pred_region
      %s230 = ssub.s32 %s13, 1
      // Predicated region
      $region13: #{tpu_custom_call.1} parent=11 // pred_check
        %p231 = pneg %p83
      $region14: #{tpu_custom_call.1} parent=11 // pred_check_branch
        %233 = sbr.rel (%p231) target = $region16
      $region15: #{tpu_custom_call.1} parent=11 // pred_region
        _
      $region16: #{tpu_custom_call.1} parent=11 // pred_fallthru
        _
      // Predicated region
      $region17: #{tpu_custom_call.1} parent=11 // pred_check
        %p234 = pneg %p104
      $region18: #{tpu_custom_call.1} parent=11 // pred_check_branch
        %236 = sbr.rel (%p234) target = $region20
      $region19: #{tpu_custom_call.1} parent=11 // pred_region
        _
      $region20: #{tpu_custom_call.1} parent=11 // pred_fallthru
        _
      // Predicated region
      $region21: #{tpu_custom_call.1} parent=11 // pred_check
        %p237 = pneg %p125
      $region22: #{tpu_custom_call.1} parent=11 // pred_check_branch
        %239 = sbr.rel (%p237) target = $region24
      $region23: #{tpu_custom_call.1} parent=11 // pred_region
        _
      $region24: #{tpu_custom_call.1} parent=11 // pred_fallthru
        _
      // Predicated region
      $region25: #{tpu_custom_call.1} parent=11 // pred_check
        %p240 = pneg %p146
      $region26: #{tpu_custom_call.1} parent=11 // pred_check_branch
        %242 = sbr.rel (%p240) target = $region28
      $region27: #{tpu_custom_call.1} parent=11 // pred_region
        _
      $region28: #{tpu_custom_call.1} parent=11 // pred_fallthru
        _
      // Predicated region
      $region29: #{tpu_custom_call.1} parent=11 // pred_check
        %p243 = pneg %p167
      $region30: #{tpu_custom_call.1} parent=11 // pred_check_branch
        %245 = sbr.rel (%p243) target = $region32
      $region31: #{tpu_custom_call.1} parent=11 // pred_region
        _
      $region32: #{tpu_custom_call.1} parent=11 // pred_fallthru
        _
      // Predicated region
      $region33: #{tpu_custom_call.1} parent=11 // pred_check
        %p246 = pneg %p188
      $region34: #{tpu_custom_call.1} parent=11 // pred_check_branch
        %248 = sbr.rel (%p246) target = $region36
      $region35: #{tpu_custom_call.1} parent=11 // pred_region
        _
      $region36: #{tpu_custom_call.1} parent=11 // pred_fallthru
        _
    $region12: #{tpu_custom_call.1} parent=5 // pred_fallthru
      _
    %p249 = scmp.lt.s32.totalorder %s13, 2
    // Predicated region
    $region37: #{tpu_custom_call.1} parent=5 // pred_check
      %p250 = pneg %p249
    $region38: #{tpu_custom_call.1} parent=5 // pred_check_branch
      %252 = sbr.rel (%p250) target = $region40
    $region39: #{tpu_custom_call.1} parent=5 // pred_region
      // Predicated region
      $region41: #{tpu_custom_call.1} parent=39 // pred_check
        %p253 = pneg %p56
      $region42: #{tpu_custom_call.1} parent=39 // pred_check_branch
        %255 = sbr.rel (%p253) target = $region44
      $region43: #{tpu_custom_call.1} parent=39 // pred_region
        %s256 = sadd.s32 %s20, %s22
        %s257 = smul.u32 2, %s256
        %p258 = scmp.lt.s32.totalorder %s21, 1
        %s259 = scalar_select %p258, %s21, 1
        %p260 = scmp.lt.s32.totalorder %s257, 1
        %s261 = scalar_select %p260, %s257, 1
        %s262 = smul.addr %s259, 6
        %s263 = sadd.s32 %s261, %s262
        %s264 = smul.addr %s263, 4
        %s265 = scalar_lea.vmem %s0, %s264
        %s266 = sadd.s32 %s20, %s22
        %s267 = smul.u32 2, %s266
      $region44: #{tpu_custom_call.1} parent=39 // pred_fallthru
        _
    $region40: #{tpu_custom_call.1} parent=5 // pred_fallthru
      _
    %p268 = scmp.le.s32.totalorder 1, %s13
    %p269 = scmp.lt.s32.totalorder %s13, 3
    %p270 = pnand %p268, %p269
    %p271 = pneg %p270
    // Predicated region
    $region45: #{tpu_custom_call.1} parent=5 // pred_check
      _
    $region46: #{tpu_custom_call.1} parent=5 // pred_check_branch
      %273 = sbr.rel (%p270) target = $region48
    $region47: #{tpu_custom_call.1} parent=5 // pred_region
      %s274 = ssub.s32 %s13, 1
      %s275 = sadd.s32 %s23, %s25
      %s276 = smul.u32 2, %s275
      %p277 = scmp.lt.s32.totalorder %s24, 1
      %s278 = scalar_select %p277, %s24, 1
      %p279 = scmp.lt.s32.totalorder %s276, 1
      %s280 = scalar_select %p279, %s276, 1
      %s281 = smul.addr %s278, 6
      %s282 = sadd.s32 %s280, %s281
      %s283 = smul.addr %s282, 4
      %s284 = scalar_lea.vmem %s0, %s283
      %p285 = pneg %p62
      %p286 = pneg %p59
      %p287 = pneg %p83
      %p288 = pneg %p80
      %p289 = pneg %p104
      %p290 = pneg %p101
      %p291 = pneg %p125
      %p292 = pneg %p122
      %p293 = pneg %p146
      %p294 = pneg %p143
      %p295 = pneg %p167
      %p296 = pneg %p164
      %p297 = pneg %p188
      %p298 = pneg %p185
      %p299 = pneg %p216
      %p300 = pneg %p213
      %p301 = scmp.lt.s32.totalorder %s23, 0
      %s302 = scalar_select %p301, %s23, 0
      %p303 = scmp.lt.s32.totalorder %s24, 1
      %s304 = scalar_select %p303, %s24, 1
      %s305 = smul.addr %s302, 2
      %s306 = sadd.s32 %s304, %s305
      %s307 = smul.addr %s306, 8
      %s308 = scalar_lea.vmem %s7, %s307
      %s309 = sadd.s32 %s23, %s25
      %s310 = smul.u32 2, %s309
      %p311 = scmp.lt.s32.totalorder %s24, 1
      %s312 = scalar_select %p311, %s24, 1
      %p313 = scmp.lt.s32.totalorder %s310, 1
      %s314 = scalar_select %p313, %s310, 1
      %s315 = smul.addr %s312, 6
      %s316 = sadd.s32 %s314, %s315
      %s317 = smul.addr %s316, 4
      %s318 = scalar_lea.vmem %s0, %s317
      %s319 = sadd.s32 %s23, %s25
      %s320 = smul.u32 2, %s319
      %p321 = scmp.lt.s32.totalorder %s23, 0
      %s322 = scalar_select %p321, %s23, 0
      %p323 = scmp.lt.s32.totalorder %s24, 1
      %s324 = scalar_select %p323, %s24, 1
      %s325 = smul.addr %s322, 2
      %s326 = sadd.s32 %s324, %s325
      %s327 = smul.addr %s326, 8
      %s328 = scalar_lea.vmem %s7, %s327
      %p329 = scmp.eq.s32.totalorder %s25, 0
      // Predicated region
      $region49: #{tpu_custom_call.1} parent=47 // pred_check
        %p330 = pneg %p329
      $region50: #{tpu_custom_call.1} parent=47 // pred_check_branch
        %332 = sbr.rel (%p330) target = $region52
      $region51: #{tpu_custom_call.1} parent=47 // pred_region
        %vm333 = vcmask 7168
        %334 = vst.msk [vmem:[%s328] sm:$0xff] %vm333, inf
      $region52: #{tpu_custom_call.1} parent=47 // pred_fallthru
        _
      %v335 = vld [vmem:[%s318] sm:$0xff]
      %s336 = scalar_lea.vmem %s318, 8
      %v337 = vld [vmem:[%s336] sm:$0xff]
      %s338 = scalar_lea.vmem %s318, 16
      %v339 = vld [vmem:[%s338] sm:$0xff]
      %v340 = vmul.f32 %v335, %v337
      %v341 = vadd.f32 %v340, %v339
      %v342 = vld [vmem:[%s1] sm:$0xff]
      %v343 = vld [vmem:[%s1 + $0x8] sm:$0xff]
      %v344 = vld [vmem:[%s1 + $0x10] sm:$0xff]
      %v345 = vld [vmem:[%s1 + $0x18] sm:$0xff]
      %v346 = vld [vmem:[%s2] sm:$0xff]
      %v347 = vld [vmem:[%s2 + $0x8] sm:$0xff]
      %v348 = vld [vmem:[%s2 + $0x10] sm:$0xff]
      %v349 = vld [vmem:[%s2 + $0x18] sm:$0xff]
      %351 = vset.pattern.permute.xlu0 0
      %352 = vperm.xlu0 %351, %v346
      %v353 = vpop.permute.xlu0 %352
      %356 = vset.pattern.permute.xlu0 0
      %357 = vperm.xlu0 %356, %v347
      %v358 = vpop.permute.xlu0 %357
      %361 = vset.pattern.permute.xlu0 0
      %362 = vperm.xlu0 %361, %v348
      %v363 = vpop.permute.xlu0 %362
      %366 = vset.pattern.permute.xlu0 0
      %367 = vperm.xlu0 %366, %v349
      %v368 = vpop.permute.xlu0 %367
      %v371 = vcombine.high %v341, %v341
      %vm372 = vcmask 31744
      %v374 = vsel %vm372, %v342, 0
      %v377 = vsel %vm372, %v343, 0
      %v380 = vsel %vm372, %v344, 0
      %v383 = vsel %vm372, %v345, 0
      %vm385 = vcmask 1043456
      %v386 = vsel %vm385, %v341, 0
      %v388 = vsel %vm385, %v371, 0
      %390 = vmatprep.subr.mxu0 0.0
      %391 = vmatpush1.msra.mxu0 0.0
      %392 = vmatprep.subr.mxu0 0.0
      %393 = vmatpush1.msra.mxu0 0.0
      %394 = vmatprep.subr.mxu0 0.0
      %395 = vmatpush1.msra.mxu0 0.0
      %396 = vmatprep.subr.mxu0 0.0
      %397 = vmatpush1.msra.mxu0 0.0
      %398 = vmatprep.subr.mxu0 0.0
      %399 = vmatpush1.msra.mxu0 0.0
      %400 = vmatprep.subr.mxu0 0.0
      %401 = vmatpush1.msra.mxu0 0.0
      %402 = vmatprep.subr.mxu0 0.0
      %403 = vmatpush1.msra.mxu0 0.0
      %404 = vmatprep.subr.mxu0 0.0
      %405 = vmatpush1.msra.mxu0 0.0
      %406 = vmatprep.subr.mxu0 0.0
      %407 = vmatpush1.msra.mxu0 0.0
      %408 = vmatprep.subr.mxu0 0.0
      %409 = vmatpush1.msra.mxu0 0.0
      %410 = vmatprep.subr.mxu0 0.0
      %411 = vmatpush1.msra.mxu0 0.0
      %412 = vmatprep.subr.mxu0 0.0
      %413 = vmatpush1.msra.mxu0 0.0
      %414 = vmatprep.subr.mxu0 0.0
      %415 = vmatpush1.msra.mxu0 0.0
      %416 = vmatprep.subr.mxu0 0.0
      %417 = vmatpush1.msra.mxu0 0.0
      %418 = vmatprep.subr.mxu0 0.0
      %419 = vmatpush1.msra.mxu0 0.0
      %420 = vmatprep.subr.mxu0 %v388
      %421 = vmatpush1.msra.mxu0 %v386
      %422 = vmatprep.subr.mxu0 0.0
      %423 = vmatpush2.msra.mxu0 0.0
      %424 = vmatprep.subr.mxu0 0.0
      %425 = vmatpush2.msra.mxu0 0.0
      %426 = vmatprep.subr.mxu0 0.0
      %427 = vmatpush2.msra.mxu0 0.0
      %428 = vmatprep.subr.mxu0 0.0
      %429 = vmatpush2.msra.mxu0 0.0
      %430 = vmatprep.subr.mxu0 0.0
      %431 = vmatpush2.msra.mxu0 0.0
      %432 = vmatprep.subr.mxu0 0.0
      %433 = vmatpush2.msra.mxu0 0.0
      %434 = vmatprep.subr.mxu0 0.0
      %435 = vmatpush2.msra.mxu0 0.0
      %436 = vmatprep.subr.mxu0 0.0
      %437 = vmatpush2.msra.mxu0 0.0
      %438 = vmatprep.subr.mxu0 0.0
      %439 = vmatpush2.msra.mxu0 0.0
      %440 = vmatprep.subr.mxu0 0.0
      %441 = vmatpush2.msra.mxu0 0.0
      %442 = vmatprep.subr.mxu0 0.0
      %443 = vmatpush2.msra.mxu0 0.0
      %444 = vmatprep.subr.mxu0 0.0
      %445 = vmatpush2.msra.mxu0 0.0
      %446 = vmatprep.subr.mxu0 0.0
      %447 = vmatpush2.msra.mxu0 0.0
      %448 = vmatprep.subr.mxu0 0.0
      %449 = vmatpush2.msra.mxu0 0.0
      %450 = vmatprep.subr.mxu0 0.0
      %451 = vmatpush2.msra.mxu0 0.0
      %452 = vmatprep.subr.mxu0 0.0
      %453 = vmatpush2.msra.mxu0 0.0
      %454 = vmatprep.mubr.f32.mxu0 0.0
      %455 = vmatmul.mubr.f32.gmra.mxu0 %v374
      %v456 = vpop.f32.mrf.mxu0
      %v457 = vadd.f32 %v353, %v456
      %v458 = vpop.f32.mrf.mxu0
      %v459 = vadd.f32 %v353, %v458
      %460 = vmatprep.mubr.f32.mxu0 0.0
      %461 = vmatmul.mubr.f32.gmra.mxu0 %v377
      %v462 = vpop.f32.mrf.mxu0
      %v463 = vadd.f32 %v358, %v462
      %v464 = vpop.f32.mrf.mxu0
      %v465 = vadd.f32 %v358, %v464
      %466 = vmatprep.mubr.f32.mxu0 0.0
      %467 = vmatmul.mubr.f32.gmra.mxu0 %v380
      %v468 = vpop.f32.mrf.mxu0
      %v469 = vadd.f32 %v363, %v468
      %v470 = vpop.f32.mrf.mxu0
      %v471 = vadd.f32 %v363, %v470
      %472 = vmatprep.mubr.f32.mxu0 0.0
      %473 = vmatmul.mubr.f32.gmra.mxu0 %v383
      %v474 = vpop.f32.mrf.mxu0
      %v475 = vadd.f32 %v368, %v474
      %v476 = vpop.f32.mrf.mxu0
      %v477 = vadd.f32 %v368, %v476
      %478 = vdwg.mxu0
      %v479 = vmax.f32 %v457, 0.0
      %v480 = vmax.f32 %v459, 0.0
      %v481 = vmax.f32 %v463, 0.0
      %v482 = vmax.f32 %v465, 0.0
      %v483 = vmax.f32 %v469, 0.0
      %v484 = vmax.f32 %v471, 0.0
      %v485 = vmax.f32 %v475, 0.0
      %v486 = vmax.f32 %v477, 0.0
      %v487 = vld [vmem:[%s3] sm:$0xff]
      %v488 = vld [vmem:[%s3 + $0x8] sm:$0xff]
      %v489 = vld [vmem:[%s3 + $0x10] sm:$0xff]
      %v490 = vld [vmem:[%s3 + $0x18] sm:$0xff]
      %v491 = vld [vmem:[%s4] sm:$0xff]
      %v492 = vld [vmem:[%s4 + $0x8] sm:$0xff]
      %v493 = vld [vmem:[%s4 + $0x10] sm:$0xff]
      %v494 = vld [vmem:[%s4 + $0x18] sm:$0xff]
      %496 = vset.pattern.permute.xlu0 0
      %497 = vperm.xlu0 %496, %v491
      %v498 = vpop.permute.xlu0 %497
      %501 = vset.pattern.permute.xlu0 0
      %502 = vperm.xlu0 %501, %v492
      %v503 = vpop.permute.xlu0 %502
      %506 = vset.pattern.permute.xlu0 0
      %507 = vperm.xlu0 %506, %v493
      %v508 = vpop.permute.xlu0 %507
      %511 = vset.pattern.permute.xlu0 0
      %512 = vperm.xlu0 %511, %v494
      %v513 = vpop.permute.xlu0 %512
      %vm515 = vcmask 261120
      %v517 = vsel %vm515, %v487, 0
      %v520 = vsel %vm515, %v488, 0
      %v523 = vsel %vm515, %v489, 0
      %v526 = vsel %vm515, %v490, 0
      %528 = vmatprep.subr.mxu0 0.0
      %529 = vmatpush1.msra.mxu0 0.0
      %530 = vmatprep.subr.mxu0 0.0
      %531 = vmatpush1.msra.mxu0 0.0
      %532 = vmatprep.subr.mxu0 0.0
      %533 = vmatpush1.msra.mxu0 0.0
      %534 = vmatprep.subr.mxu0 0.0
      %535 = vmatpush1.msra.mxu0 0.0
      %536 = vmatprep.subr.mxu0 0.0
      %537 = vmatpush1.msra.mxu0 0.0
      %538 = vmatprep.subr.mxu0 0.0
      %539 = vmatpush1.msra.mxu0 0.0
      %540 = vmatprep.subr.mxu0 0.0
      %541 = vmatpush1.msra.mxu0 0.0
      %542 = vmatprep.subr.mxu0 0.0
      %543 = vmatpush1.msra.mxu0 0.0
      %544 = vmatprep.subr.mxu0 0.0
      %545 = vmatpush1.msra.mxu0 0.0
      %546 = vmatprep.subr.mxu0 0.0
      %547 = vmatpush1.msra.mxu0 0.0
      %548 = vmatprep.subr.mxu0 0.0
      %549 = vmatpush1.msra.mxu0 0.0
      %550 = vmatprep.subr.mxu0 0.0
      %551 = vmatpush1.msra.mxu0 0.0
      %552 = vmatprep.subr.mxu0 %v486
      %553 = vmatpush1.msra.mxu0 %v485
      %554 = vmatprep.subr.mxu0 %v484
      %555 = vmatpush1.msra.mxu0 %v483
      %556 = vmatprep.subr.mxu0 %v482
      %557 = vmatpush1.msra.mxu0 %v481
      %558 = vmatprep.subr.mxu0 %v480
      %559 = vmatpush1.msra.mxu0 %v479
      %560 = vmatprep.subr.mxu0 0.0
      %561 = vmatpush2.msra.mxu0 0.0
      %562 = vmatprep.subr.mxu0 0.0
      %563 = vmatpush2.msra.mxu0 0.0
      %564 = vmatprep.subr.mxu0 0.0
      %565 = vmatpush2.msra.mxu0 0.0
      %566 = vmatprep.subr.mxu0 0.0
      %567 = vmatpush2.msra.mxu0 0.0
      %568 = vmatprep.subr.mxu0 0.0
      %569 = vmatpush2.msra.mxu0 0.0
      %570 = vmatprep.subr.mxu0 0.0
      %571 = vmatpush2.msra.mxu0 0.0
      %572 = vmatprep.subr.mxu0 0.0
      %573 = vmatpush2.msra.mxu0 0.0
      %574 = vmatprep.subr.mxu0 0.0
      %575 = vmatpush2.msra.mxu0 0.0
      %576 = vmatprep.subr.mxu0 0.0
      %577 = vmatpush2.msra.mxu0 0.0
      %578 = vmatprep.subr.mxu0 0.0
      %579 = vmatpush2.msra.mxu0 0.0
      %580 = vmatprep.subr.mxu0 0.0
      %581 = vmatpush2.msra.mxu0 0.0
      %582 = vmatprep.subr.mxu0 0.0
      %583 = vmatpush2.msra.mxu0 0.0
      %584 = vmatprep.subr.mxu0 0.0
      %585 = vmatpush2.msra.mxu0 0.0
      %586 = vmatprep.subr.mxu0 0.0
      %587 = vmatpush2.msra.mxu0 0.0
      %588 = vmatprep.subr.mxu0 0.0
      %589 = vmatpush2.msra.mxu0 0.0
      %590 = vmatprep.subr.mxu0 0.0
      %591 = vmatpush2.msra.mxu0 0.0
      %592 = vmatprep.mubr.f32.mxu0 0.0
      %593 = vmatmul.mubr.f32.gmra.mxu0 %v517
      %v594 = vpop.f32.mrf.mxu0
      %v595 = vadd.f32 %v498, %v594
      %v596 = vpop.f32.mrf.mxu0
      %v597 = vadd.f32 %v498, %v596
      %598 = vmatprep.mubr.f32.mxu0 0.0
      %599 = vmatmul.mubr.f32.gmra.mxu0 %v520
      %v600 = vpop.f32.mrf.mxu0
      %v601 = vadd.f32 %v503, %v600
      %v602 = vpop.f32.mrf.mxu0
      %v603 = vadd.f32 %v503, %v602
      %604 = vmatprep.mubr.f32.mxu0 0.0
      %605 = vmatmul.mubr.f32.gmra.mxu0 %v523
      %v606 = vpop.f32.mrf.mxu0
      %v607 = vadd.f32 %v508, %v606
      %v608 = vpop.f32.mrf.mxu0
      %v609 = vadd.f32 %v508, %v608
      %610 = vmatprep.mubr.f32.mxu0 0.0
      %611 = vmatmul.mubr.f32.gmra.mxu0 %v526
      %v612 = vpop.f32.mrf.mxu0
      %v613 = vadd.f32 %v513, %v612
      %v614 = vpop.f32.mrf.mxu0
      %v615 = vadd.f32 %v513, %v614
      %616 = vdwg.mxu0
      %v617 = vxor.u32 %v595, 2147483648
      %v618 = vxor.u32 %v597, 2147483648
      %v619 = vxor.u32 %v601, 2147483648
      %v620 = vxor.u32 %v603, 2147483648
      %v621 = vxor.u32 %v607, 2147483648
      %v622 = vxor.u32 %v609, 2147483648
      %v623 = vxor.u32 %v613, 2147483648
      %v624 = vxor.u32 %v615, 2147483648
      %v625 = vmul.f32 %v617, 1.442695
      %v626 = vpow.pop %v625
      %v627 = vmul.f32 %v618, 1.442695
      %v628 = vpow.pop %v627
      %v629 = vmul.f32 %v619, 1.442695
      %v630 = vpow.pop %v629
      %v631 = vmul.f32 %v620, 1.442695
      %v632 = vpow.pop %v631
      %v633 = vmul.f32 %v621, 1.442695
      %v634 = vpow.pop %v633
      %v635 = vmul.f32 %v622, 1.442695
      %v636 = vpow.pop %v635
      %v637 = vmul.f32 %v623, 1.442695
      %v638 = vpow.pop %v637
      %v639 = vmul.f32 %v624, 1.442695
      %v640 = vpow.pop %v639
      %v641 = vadd.f32 %v626, 1.0
      %v642 = vadd.f32 %v628, 1.0
      %v643 = vadd.f32 %v630, 1.0
      %v644 = vadd.f32 %v632, 1.0
      %v645 = vadd.f32 %v634, 1.0
      %v646 = vadd.f32 %v636, 1.0
      %v647 = vadd.f32 %v638, 1.0
      %v648 = vadd.f32 %v640, 1.0
      %v649 = vrcp.pop %v641
      %v650 = vmul.f32 1.0, %v649
      %v651 = vrcp.pop %v642
      %v652 = vmul.f32 1.0, %v651
      %v653 = vrcp.pop %v643
      %v654 = vmul.f32 1.0, %v653
      %v655 = vrcp.pop %v644
      %v656 = vmul.f32 1.0, %v655
      %v657 = vrcp.pop %v645
      %v658 = vmul.f32 1.0, %v657
      %v659 = vrcp.pop %v646
      %v660 = vmul.f32 1.0, %v659
      %v661 = vrcp.pop %v647
      %v662 = vmul.f32 1.0, %v661
      %v663 = vrcp.pop %v648
      %v664 = vmul.f32 1.0, %v663
      %v665 = vld [vmem:[%s5] sm:$0xff]
      %v667 = vsel %vm515, %v665, 0
      %669 = vmatprep.subr.mxu0 0.0
      %670 = vmatpush1.msra.mxu0 0.0
      %671 = vmatprep.subr.mxu0 0.0
      %672 = vmatpush1.msra.mxu0 0.0
      %673 = vmatprep.subr.mxu0 0.0
      %674 = vmatpush1.msra.mxu0 0.0
      %675 = vmatprep.subr.mxu0 0.0
      %676 = vmatpush1.msra.mxu0 0.0
      %677 = vmatprep.subr.mxu0 0.0
      %678 = vmatpush1.msra.mxu0 0.0
      %679 = vmatprep.subr.mxu0 0.0
      %680 = vmatpush1.msra.mxu0 0.0
      %681 = vmatprep.subr.mxu0 0.0
      %682 = vmatpush1.msra.mxu0 0.0
      %683 = vmatprep.subr.mxu0 0.0
      %684 = vmatpush1.msra.mxu0 0.0
      %685 = vmatprep.subr.mxu0 0.0
      %686 = vmatpush1.msra.mxu0 0.0
      %687 = vmatprep.subr.mxu0 0.0
      %688 = vmatpush1.msra.mxu0 0.0
      %689 = vmatprep.subr.mxu0 0.0
      %690 = vmatpush1.msra.mxu0 0.0
      %691 = vmatprep.subr.mxu0 0.0
      %692 = vmatpush1.msra.mxu0 0.0
      %693 = vmatprep.subr.mxu0 %v664
      %694 = vmatpush1.msra.mxu0 %v662
      %695 = vmatprep.subr.mxu0 %v660
      %696 = vmatpush1.msra.mxu0 %v658
      %697 = vmatprep.subr.mxu0 %v656
      %698 = vmatpush1.msra.mxu0 %v654
      %699 = vmatprep.subr.mxu0 %v652
      %700 = vmatpush1.msra.mxu0 %v650
      %701 = vmatprep.subr.mxu0 0.0
      %702 = vmatpush2.msra.mxu0 0.0
      %703 = vmatprep.subr.mxu0 0.0
      %704 = vmatpush2.msra.mxu0 0.0
      %705 = vmatprep.subr.mxu0 0.0
      %706 = vmatpush2.msra.mxu0 0.0
      %707 = vmatprep.subr.mxu0 0.0
      %708 = vmatpush2.msra.mxu0 0.0
      %709 = vmatprep.subr.mxu0 0.0
      %710 = vmatpush2.msra.mxu0 0.0
      %711 = vmatprep.subr.mxu0 0.0
      %712 = vmatpush2.msra.mxu0 0.0
      %713 = vmatprep.subr.mxu0 0.0
      %714 = vmatpush2.msra.mxu0 0.0
      %715 = vmatprep.subr.mxu0 0.0
      %716 = vmatpush2.msra.mxu0 0.0
      %717 = vmatprep.subr.mxu0 0.0
      %718 = vmatpush2.msra.mxu0 0.0
      %719 = vmatprep.subr.mxu0 0.0
      %720 = vmatpush2.msra.mxu0 0.0
      %721 = vmatprep.subr.mxu0 0.0
      %722 = vmatpush2.msra.mxu0 0.0
      %723 = vmatprep.subr.mxu0 0.0
      %724 = vmatpush2.msra.mxu0 0.0
      %725 = vmatprep.subr.mxu0 0.0
      %726 = vmatpush2.msra.mxu0 0.0
      %727 = vmatprep.subr.mxu0 0.0
      %728 = vmatpush2.msra.mxu0 0.0
      %729 = vmatprep.subr.mxu0 0.0
      %730 = vmatpush2.msra.mxu0 0.0
      %731 = vmatprep.subr.mxu0 0.0
      %732 = vmatpush2.msra.mxu0 0.0
      %733 = vmatprep.mubr.f32.mxu0 0.0
      %734 = vmatmul.mubr.f32.gmra.mxu0 %v667
      %v735 = vpop.f32.mrf.mxu0
      %v736 = vadd.f32 0.0, %v735
      %v737 = vpop.f32.mrf.mxu0
      %v738 = vadd.f32 0.0, %v737
      %739 = vdwg.mxu0
      %v740 = vmul.f32 %v650, %v650
      %v741 = vmul.f32 %v652, %v652
      %v742 = vmul.f32 %v654, %v654
      %v743 = vmul.f32 %v656, %v656
      %v744 = vmul.f32 %v658, %v658
      %v745 = vmul.f32 %v660, %v660
      %v746 = vmul.f32 %v662, %v662
      %v747 = vmul.f32 %v664, %v664
      %v748 = vadd.f32 %v740, %v742
      %v749 = vadd.f32 %v748, %v744
      %v750 = vadd.f32 %v749, %v746
      %v751 = vrot.slane %v750, 4
      %v752 = vadd.f32 %v750, %v751
      %v753 = vrot.slane %v752, 2
      %v754 = vadd.f32 %v752, %v753
      %v755 = vrot.slane %v754, 1
      %v756 = vadd.f32 %v754, %v755
      %v757 = vadd.f32 %v741, %v743
      %v758 = vadd.f32 %v757, %v745
      %v759 = vadd.f32 %v758, %v747
      %v760 = vrot.slane %v759, 4
      %v761 = vadd.f32 %v759, %v760
      %v762 = vrot.slane %v761, 2
      %v763 = vadd.f32 %v761, %v762
      %v764 = vrot.slane %v763, 1
      %v765 = vadd.f32 %v763, %v764
      %v766 = vld [vmem:[%s6] sm:$0xff]
      %v767 = vmul.f32 %v736, 2.0
      %v768 = vmul.f32 %v738, 2.0
      %770 = vset.pattern.permute.xlu0 0
      %771 = vperm.xlu0 %770, %v766
      %v772 = vpop.permute.xlu0 %771
      %v774 = vsub.f32 %v772, %v767
      %v775 = vsub.f32 %v772, %v768
      %v776 = vadd.f32 %v774, %v756
      %v777 = vadd.f32 %v775, %v765
      %v778 = vmax.f32 %v776, 0.0
      %v779 = vmax.f32 %v777, 0.0
      %v780 = vld [vmem:[%s328] sm:$0xff]
      %v781 = vmin.f32 %v778, %v779
      %782 = vmin.xlane.f32.xlu0 %v781
      %v783 = vpop.xlane.xlu0 %782
      %v784 = vmin.f32 %v780, %v783
      %vm785 = vcmask 7168
      %786 = vst.msk [vmem:[%s328] sm:$0xff] %vm785, %v784
      %p787 = scmp.lt.s32.totalorder %s23, 0
      %s788 = scalar_select %p787, %s23, 0
      %p789 = scmp.lt.s32.totalorder %s24, 1
      %s790 = scalar_select %p789, %s24, 1
      %s791 = smul.addr %s788, 2
      %s792 = sadd.s32 %s790, %s791
      %s793 = smul.addr %s792, 8
      %s794 = scalar_lea.vmem %s7, %s793
      // Predicated region
      $region53: #{tpu_custom_call.1} parent=47 // pred_check
        %p795 = pneg %p213
      $region54: #{tpu_custom_call.1} parent=47 // pred_check_branch
        %797 = sbr.rel (%p795) target = $region56
      $region55: #{tpu_custom_call.1} parent=47 // pred_region
        _
      $region56: #{tpu_custom_call.1} parent=47 // pred_fallthru
        _
    $region48: #{tpu_custom_call.1} parent=5 // pred_fallthru
      _
    %p798 = scmp.le.s32.totalorder 2, %s13
    // Predicated region
    $region57: #{tpu_custom_call.1} parent=5 // pred_check
      %p799 = pneg %p798
    $region58: #{tpu_custom_call.1} parent=5 // pred_check_branch
      %801 = sbr.rel (%p799) target = $region60
    $region59: #{tpu_custom_call.1} parent=5 // pred_region
      %s802 = ssub.s32 %s13, 2
      // Predicated region
      $region61: #{tpu_custom_call.1} parent=59 // pred_check
        %p803 = pneg %p219
      $region62: #{tpu_custom_call.1} parent=59 // pred_check_branch
        %805 = sbr.rel (%p803) target = $region64
      $region63: #{tpu_custom_call.1} parent=59 // pred_region
        %p806 = scmp.lt.s32.totalorder %s26, 0
        %s807 = scalar_select %p806, %s26, 0
        %p808 = scmp.lt.s32.totalorder %s27, 1
        %s809 = scalar_select %p808, %s27, 1
        %s810 = smul.addr %s807, 2
        %s811 = sadd.s32 %s809, %s810
        %s812 = smul.addr %s811, 8
        %s813 = scalar_lea.vmem %s7, %s812
      $region64: #{tpu_custom_call.1} parent=59 // pred_fallthru
        _
    $region60: #{tpu_custom_call.1} parent=5 // pred_fallthru
      _
  $region6: #{tpu_custom_call.1} parent=0 // loop_footer
    %s17 = sadd.s32 1, %s13
  $region7: #{tpu_custom_call.1} parent=0 // loop_footer_branch
    %12 = sbr.rel target = $region3
  $region8: #{tpu_custom_call.1} parent=0 // loop_exit
    _

</llo_original>
